<compile_context>
chip_gen: v6e
topology: v6e:2x2x1
jax: 0.10.0
libtpu: 0.0.40
codegen_flags: <defaults>
</compile_context>

<pallas_src>
import jax
import jax.numpy as jnp
from jax import lax
from jax.experimental import pallas as pl
from jax.experimental.pallas import tpu as pltpu

LANE = 128      # TPU lane width (last-dim granule)
SUBLANE = 8     # f32 sublane granule (second-to-last-dim granule)


def _round_up(x, m):
    return (x + m - 1) // m * m


def _round_down(x, m):
    return x // m * m


def patch_embed_kernel(x_ref, w_ref, b_ref, o_ref):
    """One (TM, K_pad) x (K_pad, N_pad) tile of the patch-embedding GEMM + bias."""
    acc = jnp.dot(x_ref[...], w_ref[...], preferred_element_type=jnp.float32)
    # Bias add + cast stay in f32 (v5e has no bf16 VPU); single lane-dense store.
    o_ref[...] = (acc + b_ref[...]).astype(o_ref.dtype)


def prepare_gemm_params(weight, bias, *, compute_dtype=None, lane_pad=LANE):
    """Conv weight (out, c, p, p) -> lane-dense GEMM operands (K_pad, N_pad), (1, N_pad).

    Both K (contraction) and N (embed dim) are zero-padded to multiples of 128 so
    the kernel sees unmasked, lane-dense loads/stores.  In a real model call this
    once at init (the transposed/padded weight is a constant), not per forward.
    """
    out_size = weight.shape[0]
    k = weight.shape[1] * weight.shape[2] * weight.shape[3]
    k_pad = _round_up(k, lane_pad)
    n_pad = _round_up(out_size, lane_pad)

    w2 = weight.reshape(out_size, k).T                       # (K, N)
    if compute_dtype is not None:
        w2 = w2.astype(compute_dtype)                        # cast before padding
    if (k_pad, n_pad) != (k, out_size):
        w2 = jnp.pad(w2, ((0, k_pad - k), (0, n_pad - out_size)))

    b2 = bias.astype(jnp.float32).reshape(1, out_size)       # f32 epilogue
    if n_pad != out_size:
        b2 = jnp.pad(b2, ((0, 0), (0, n_pad - out_size)))
    return w2, b2


def patch_embed_gemm(patches, w2, b2, *, out_dtype, block_m=512):
    m, k_pad = patches.shape
    k_w, n_pad = w2.shape
    assert k_w == k_pad and b2.shape == (1, n_pad), (patches.shape, w2.shape, b2.shape)

    # --- Row tile --------------------------------------------------------------
    # tm is a multiple of the sublane granule; a ragged last block is handled by
    # Pallas masking, so M is NOT padded/copied in HBM.
    tm = min(block_m, _round_up(m, SUBLANE))
    grid_m = pl.cdiv(m, tm)

    # v7x megacore: make sure the "parallel" M axis has >= 2 steps so both
    # TensorCores get work (prefer 256-multiples to match the 2x256^2 MXU).
    if grid_m < 2 and m > SUBLANE:
        half = (m + 1) // 2
        tm = _round_down(half, 256) or _round_up(half, SUBLANE)
        grid_m = pl.cdiv(m, tm)

    # --- VMEM budget -------------------------------------------------------------
    a_bytes = jnp.dtype(patches.dtype).itemsize
    w_bytes = jnp.dtype(w2.dtype).itemsize
    o_bytes = jnp.dtype(out_dtype).itemsize
    try:
        vmem_cap = int(pltpu.get_tpu_info().vmem_capacity_bytes)  # 128 MiB v5e/v6e, 64 MiB v7x
    except Exception:
        vmem_cap = 64 << 20                                       # conservative fallback
    budget = int(0.75 * vmem_cap)  # headroom for Mosaic scratch / semaphores / DMA descriptors

    def working_set(tm_):
        return (2 * tm_ * k_pad * a_bytes        # A tile: double-buffered
                + 2 * tm_ * n_pad * o_bytes      # O tile: double-buffered
                + k_pad * n_pad * w_bytes        # W: resident, single-buffered
                + n_pad * 4)                     # bias: resident, f32

    while working_set(tm) > budget and tm > SUBLANE:
        tm = max(_round_down(tm // 2, SUBLANE), SUBLANE)
        grid_m = pl.cdiv(m, tm)
    if working_set(tm) > budget:
        # TODO(synk): add N/K tiling for embed dims whose resident weight alone
        # exceeds the VMEM budget instead of failing.
        raise ValueError(
            f"patch_embed_gemm working set {working_set(tm)} B exceeds VMEM budget "
            f"{budget} B; K/N tiling is required for this problem size.")

    vmem_limit = int(min(max(int(working_set(tm) * 1.5), 32 << 20), budget))

    cost = pl.CostEstimate(
        flops=2 * m * k_pad * n_pad,
        transcendentals=0,
        bytes_accessed=(m * k_pad * a_bytes + k_pad * n_pad * w_bytes
                        + m * n_pad * o_bytes + n_pad * 4))

    compiler_params = pltpu.CompilerParams(
        dimension_semantics=("parallel",),        # megacore-shard M (v7x)
        vmem_limit_bytes=vmem_limit,
        # Under jit, let XLA fuse the patchify cast/reshape/transpose chain into
        # the A-operand pipeline instead of materializing an extra HBM copy.
        allow_input_fusion=[True, False, False],
    )

    def build(single_buffer_resident):
        resident = (dict(pipeline_mode=pl.Buffered(1))
                    if single_buffer_resident else {})
        return pl.pallas_call(
            patch_embed_kernel,
            out_shape=jax.ShapeDtypeStruct((m, n_pad), out_dtype),
            grid=(grid_m,),
            in_specs=[
                pl.BlockSpec((tm, k_pad), lambda i: (i, 0)),                  # A marches over M
                pl.BlockSpec((k_pad, n_pad), lambda i: (0, 0), **resident),   # W resident
                pl.BlockSpec((1, n_pad), lambda i: (0, 0), **resident),       # bias resident
            ],
            out_specs=pl.BlockSpec((tm, n_pad), lambda i: (i, 0)),
            compiler_params=compiler_params,
            cost_estimate=cost,
        )

    try:
        # Single-buffer the index-invariant W / bias (halves their VMEM footprint);
        # A / O stay double-buffered for the software pipeline.
        return build(True)(patches, w2, b2)
    except Exception:
        # Graceful fallback if BlockSpec(pipeline_mode=...) is not supported by the
        # top-level TPU pipeliner in this jax build.
        return build(False)(patches, w2, b2)


def image_patcher(x, weight, bias, patch_size, *,
                  compute_dtype=jnp.bfloat16, out_dtype=None, block_m=512):
    """x: (b, c, h, w) NCHW, weight: (out, c, p, p), bias: (out,).
    Returns (b, num_patches, out) exactly like ImagePatcher.forward.
    compute_dtype=jnp.bfloat16 (default) feeds the MXU in bf16 with f32
    accumulation; pass jnp.float32 (or None) for an exact f32 path."""
    b, c, h, w = x.shape
    p = patch_size
    out_size = weight.shape[0]
    nph, npw = h // p, w // p
    if h % p or w % p:
        # Conv2d with kernel == stride silently drops the spatial remainder; mirror it.
        x = x[:, :, :nph * p, :npw * p]
    num_patches = nph * npw
    m = b * num_patches
    k = c * p * p
    k_pad = _round_up(k, LANE)

    if out_dtype is None:
        out_dtype = x.dtype

    # Cast FIRST so the patchify transpose moves at most half the bytes on the
    # bf16 path; under jit the whole chain can fuse into the kernel's A pipeline.
    if compute_dtype is not None and x.dtype != compute_dtype:
        x = x.astype(compute_dtype)

    patches = x.reshape(b, c, nph, p, npw, p)
    patches = patches.transpose(0, 2, 4, 1, 3, 5).reshape(m, k)
    if k_pad != k:
        patches = jnp.pad(patches, ((0, 0), (0, k_pad - k)))   # lane-align K

    w2, b2 = prepare_gemm_params(weight, bias, compute_dtype=compute_dtype)
    out = patch_embed_gemm(patches, w2, b2, out_dtype=out_dtype, block_m=block_m)

    # NOTE(perf): when out_size is already a multiple of 128 this slice is a no-op;
    # otherwise a full model should keep the lane-padded width downstream.
    if out.shape[1] != out_size:
        out = out[:, :out_size]
    return out.reshape(b, num_patches, out_size)


def reference(x, weight, bias, patch_size):
    """Pure-JAX reference mirroring the PyTorch forward (lax conv, NCHW)."""
    y = lax.conv_general_dilated(
        x, weight,
        window_strides=(patch_size, patch_size),
        padding="VALID",
        dimension_numbers=("NCHW", "OIHW", "NCHW"),
    ) + bias.reshape(1, -1, 1, 1)
    b = x.shape[0]
    out_size = weight.shape[0]
    y = y.reshape(b, out_size, -1)
    return jnp.transpose(y, (0, 2, 1))


if __name__ == "__main__":
    # ImagePatcher(in_size=4, out_size=32, patch_size=4) on a (2, 4, 16, 16) input.
    batch, in_size, out_size, patch_size, spatial = 2, 4, 32, 4, 16

    key = jax.random.PRNGKey(0)
    kx, kw, kb = jax.random.split(key, 3)

    x = jax.random.normal(kx, (batch, in_size, spatial, spatial), dtype=jnp.float32)
    fan_in = in_size * patch_size * patch_size
    bound = 1.0 / (fan_in ** 0.5)
    weight = jax.random.uniform(
        kw, (out_size, in_size, patch_size, patch_size),
        minval=-bound, maxval=bound, dtype=jnp.float32)
    bias = jax.random.uniform(kb, (out_size,), minval=-bound, maxval=bound,
                              dtype=jnp.float32)

    y_ref = reference(x, weight, bias, patch_size)

    # Exact f32 path (matches the conv reference tightly).
    y_f32 = image_patcher(x, weight, bias, patch_size, compute_dtype=jnp.float32)
    jax.block_until_ready(y_f32)
    assert y_f32.shape == (batch, (spatial // patch_size) ** 2, out_size), y_f32.shape
    assert jnp.allclose(y_f32, y_ref, atol=1e-5, rtol=1e-5), "f32 mismatch vs reference"

    # Default production path: bf16 A/W through the MXU, f32 accumulation + epilogue.
    y_bf16 = image_patcher(x, weight, bias, patch_size)
    jax.block_until_ready(y_bf16)
    assert y_bf16.shape == y_f32.shape, y_bf16.shape
    assert jnp.allclose(y_bf16, y_ref, atol=2e-2, rtol=2e-2), "bf16 mismatch vs reference"

    print("KERNEL_OK")
</pallas_src>

<mosaic_0001>
module attributes {stable_mosaic.version = 11 : i64} {
  func.func @patch_embed_kernel(%arg0: i32, %arg1: memref<16x128xf32, #tpu.memory_space<vmem>>, %arg2: memref<128x128xf32, #tpu.memory_space<vmem>>, %arg3: memref<1x128xf32, #tpu.memory_space<vmem>>, %arg4: memref<16x128xf32, #tpu.memory_space<vmem>>) attributes {dimension_semantics = [#tpu.dimension_semantics<parallel>], iteration_bounds = array<i64: 2>, scalar_prefetch = 0 : i64, scratch_operands = 0 : i64, tpu.core_type = #tpu.core_type<tc>, window_params = [{transform_indices = @transform_0, window_bounds = array<i64: 16, 128>}, {pipeline_mode = #tpu.pipeline_mode<synchronous>, transform_indices = @transform_1, window_bounds = array<i64: 128, 128>}, {pipeline_mode = #tpu.pipeline_mode<synchronous>, transform_indices = @transform_2, window_bounds = array<i64: 1, 128>}, {transform_indices = @transform_3, window_bounds = array<i64: 16, 128>}]} {
    %c0 = arith.constant 0 : index
    %c0_0 = arith.constant 0 : index
    %0 = vector.load %arg1[%c0, %c0_0] : memref<16x128xf32, #tpu.memory_space<vmem>>, vector<16x128xf32>
    %c0_1 = arith.constant 0 : index
    %c0_2 = arith.constant 0 : index
    %1 = vector.load %arg2[%c0_1, %c0_2] : memref<128x128xf32, #tpu.memory_space<vmem>>, vector<128x128xf32>
    %cst = arith.constant dense<0.000000e+00> : vector<16x128xf32>
    %2 = tpu.matmul %0, %1, %cst {dimension_numbers = #tpu.dot_dimension_numbers<[1], [0], [0], [1], [0, 0, 1, 1], [], []>} : vector<16x128xf32>, vector<128x128xf32>, vector<16x128xf32> -> vector<16x128xf32>
    %c0_3 = arith.constant 0 : index
    %c0_4 = arith.constant 0 : index
    %3 = vector.load %arg3[%c0_3, %c0_4] : memref<1x128xf32, #tpu.memory_space<vmem>>, vector<1x128xf32>
    %4 = vector.broadcast %3 : vector<1x128xf32> to vector<16x128xf32>
    %5 = arith.addf %2, %4 : vector<16x128xf32>
    %c0_5 = arith.constant 0 : index
    %c0_6 = arith.constant 0 : index
    %6 = vector.load %arg4[%c0_5, %c0_6] : memref<16x128xf32, #tpu.memory_space<vmem>>, vector<16x128xf32>
    tpu.vector_store %arg4[%c0_5, %c0_6], %5 {strides = array<i32>} : memref<16x128xf32, #tpu.memory_space<vmem>>, vector<16x128xf32>,
    return
  }
  func.func @transform_0(%arg0: i32) -> (i32, i32) {
    %c0_i32 = arith.constant 0 : i32
    %c0_i32_0 = arith.constant 0 : i32
    return %arg0, %c0_i32 : i32, i32
  }
  func.func @transform_1(%arg0: i32) -> (i32, i32) {
    %c0_i32 = arith.constant 0 : i32
    %c0_i32_0 = arith.constant 0 : i32
    %c0_i32_1 = arith.constant 0 : i32
    return %c0_i32, %c0_i32_0 : i32, i32
  }
  func.func @transform_2(%arg0: i32) -> (i32, i32) {
    %c0_i32 = arith.constant 0 : i32
    %c0_i32_0 = arith.constant 0 : i32
    %c0_i32_1 = arith.constant 0 : i32
    return %c0_i32, %c0_i32_0 : i32, i32
  }
  func.func @transform_3(%arg0: i32) -> (i32, i32) {
    %c0_i32 = arith.constant 0 : i32
    %c0_i32_0 = arith.constant 0 : i32
    return %arg0, %c0_i32 : i32, i32
  }
}

module attributes {stable_mosaic.version = 11 : i64} {
  func.func @patch_embed_kernel(%arg0: i32, %arg1: memref<16x128xf32, #tpu.memory_space<vmem>>, %arg2: memref<128x128xf32, #tpu.memory_space<vmem>>, %arg3: memref<1x128xf32, #tpu.memory_space<vmem>>, %arg4: memref<16x128xf32, #tpu.memory_space<vmem>>) attributes {dimension_semantics = [#tpu.dimension_semantics<parallel>], iteration_bounds = array<i64: 2>, scalar_prefetch = 0 : i64, scratch_operands = 0 : i64, tpu.core_type = #tpu.core_type<tc>, window_params = [{transform_indices = @transform_0, window_bounds = array<i64: 16, 128>}, {pipeline_mode = #tpu.pipeline_mode<synchronous>, transform_indices = @transform_1, window_bounds = array<i64: 128, 128>}, {pipeline_mode = #tpu.pipeline_mode<synchronous>, transform_indices = @transform_2, window_bounds = array<i64: 1, 128>}, {transform_indices = @transform_3, window_bounds = array<i64: 16, 128>}]} {
    %c0 = arith.constant 0 : index
    %c0_0 = arith.constant 0 : index
    %0 = vector.load %arg1[%c0, %c0_0] : memref<16x128xf32, #tpu.memory_space<vmem>>, vector<16x128xf32>
    %c0_1 = arith.constant 0 : index
    %c0_2 = arith.constant 0 : index
    %1 = vector.load %arg2[%c0_1, %c0_2] : memref<128x128xf32, #tpu.memory_space<vmem>>, vector<128x128xf32>
    %cst = arith.constant dense<0.000000e+00> : vector<16x128xf32>
    %2 = tpu.matmul %0, %1, %cst {dimension_numbers = #tpu.dot_dimension_numbers<[1], [0], [0], [1], [0, 0, 1, 1], [], []>} : vector<16x128xf32>, vector<128x128xf32>, vector<16x128xf32> -> vector<16x128xf32>
    %c0_3 = arith.constant 0 : index
    %c0_4 = arith.constant 0 : index
    %3 = vector.load %arg3[%c0_3, %c0_4] : memref<1x128xf32, #tpu.memory_space<vmem>>, vector<1x128xf32>
    %4 = vector.broadcast %3 : vector<1x128xf32> to vector<16x128xf32>
    %5 = arith.addf %2, %4 : vector<16x128xf32>
    %c0_5 = arith.constant 0 : index
    %c0_6 = arith.constant 0 : index
    %6 = vector.load %arg4[%c0_5, %c0_6] : memref<16x128xf32, #tpu.memory_space<vmem>>, vector<16x128xf32>
    tpu.vector_store %arg4[%c0_5, %c0_6], %5 {strides = array<i32>} : memref<16x128xf32, #tpu.memory_space<vmem>>, vector<16x128xf32>,
    return
  }
  func.func @transform_0(%arg0: i32) -> (i32, i32) {
    %c0_i32 = arith.constant 0 : i32
    %c0_i32_0 = arith.constant 0 : i32
    return %arg0, %c0_i32 : i32, i32
  }
  func.func @transform_1(%arg0: i32) -> (i32, i32) {
    %c0_i32 = arith.constant 0 : i32
    %c0_i32_0 = arith.constant 0 : i32
    %c0_i32_1 = arith.constant 0 : i32
    return %c0_i32, %c0_i32_0 : i32, i32
  }
  func.func @transform_2(%arg0: i32) -> (i32, i32) {
    %c0_i32 = arith.constant 0 : i32
    %c0_i32_0 = arith.constant 0 : i32
    %c0_i32_1 = arith.constant 0 : i32
    return %c0_i32, %c0_i32_0 : i32, i32
  }
  func.func @transform_3(%arg0: i32) -> (i32, i32) {
    %c0_i32 = arith.constant 0 : i32
    %c0_i32_0 = arith.constant 0 : i32
    return %arg0, %c0_i32 : i32, i32
  }
}

</mosaic_0001>

<llo_original>
// kernel: tpu_custom_call.1
$region0: #{tpu_custom_call.1}
  #allocation0 [shape = 'u32[]', space=smem, size = 0x4, offset = 0x4, fixed_abs, tag = 'smem constant byte address 0x4 - core index']
  #allocation1 [shape = 'u32[144,128]{1,0:T(1,128)}', space=vmem, size = 0x12000, scoped, tag = 'internal scratch']
  %s0 = inlined_call_operand.hbm [shape: f32[32,128], index: 0, kind: input, shape index: {}]
  %s1 = inlined_call_operand.hbm [shape: f32[128,128], index: 1, kind: input, shape index: {}]
  %s2 = inlined_call_operand.vmem [shape: f32[1,128], index: 2, kind: input, shape index: {}]
  %s3 = inlined_call_operand.hbm [shape: f32[32,128], index: 3, kind: output, shape index: {}]
  %s4 = sld [smem:[#allocation0]]
  $region53: #{tpu_custom_call.1} parent=0
    _
  %s6 = ssub.s32 1, %s4
  %s7 = scalar_select 0, %s6, %s4
  $region1: #{tpu_custom_call.1} parent=0
    #allocation2 [shape = 'u8[16384]{0}', space=vmem, size = 0x4000, scoped, tag = 'input window, operand 0']
    #allocation3 [shape = 's32[2]{0}', space=sflag, size = 0x8, scoped, tag = 'scoped memory for tpu_custom_call.1']
    #allocation4 [shape = 's32[2]{0}', space=sflag, size = 0x8, scoped, tag = 'scoped memory for tpu_custom_call.1']
    #allocation5 [shape = 'u8[65536]{0}', space=vmem, size = 0x10000, scoped, tag = 'input window, operand 1, single buffered']
    #allocation6 [shape = 's32[1]{0}', space=sflag, size = 0x4, scoped, tag = 'scoped memory for tpu_custom_call.1']
    #allocation7 [shape = 'u8[16384]{0}', space=vmem, size = 0x4000, scoped, tag = 'output window, operand 0']
    %8 = vsyncpa [#allocation3], 0
    %s9 = scalar_lea.sflag [#allocation3], 1
    %10 = vsyncpa %s9, 0
    %11 = vsyncpa [#allocation6], 0
    %12 = vsyncpa [#allocation4], 0
    %s13 = scalar_lea.sflag [#allocation4], 1
    %14 = vsyncpa %s13, 0
    loop: start=0, step=1, limit=4
    $region2: #{tpu_custom_call.1} parent=1 // loop_pre_header
      _
    $region3: #{tpu_custom_call.1} parent=1 // loop_header
      %s16 = sphi 0, %s20
      %p17 = scmp.ge.s32.totalorder %s16, 4
      %s26 = sphi 0, %s28
      %s29 = sphi 0, %s26
      %s30 = sphi 0, %s29
      %s46 = sphi 0, %s30
      %s50 = sphi 0, %s50
      %s52 = sphi 0, %s50
      %s53 = sphi 0, %s52
      %s67 = sphi 0, %s53
      %s71 = sphi 0, %s71
      %s73 = sphi 0, %s71
      %s74 = sphi 0, %s73
      %s88 = sphi 0, %s74
      %s94 = sphi 0, %s96
      %s97 = sphi 0, %s94
      %s98 = sphi 0, %s97
      %s114 = sphi 0, %s98
    $region4: #{tpu_custom_call.1} parent=1 // loop_header_branch
      %19 = sbr.rel (%p17) target = $region8
    $region5: #{tpu_custom_call.1} parent=1 // loop_body
      %s21 = ssub.s32 %s16, 1
      %s22 = ssub.s32 %s16, 2
      %s23 = sadd.s32 %s16, 1
      %s24 = ssub.s32 %s16, %s23
      %p25 = scmp.eq.s32.totalorder %s24, 0
      %s27 = sadd.s32 %s26, 1
      %s28 = scalar_select %p25, %s26, %s27
      %p31 = pneg %p25
      %p32 = scmp.eq.s32.totalorder %s16, 1
      %p33 = por %p31, %p32
      %p34 = scmp.ne.s32.totalorder %s26, %s29
      %p35 = scmp.eq.s32.totalorder %s16, 0
      %p36 = por %p34, %p35
      %p37 = scmp.ne.s32.totalorder %s26, %s29
      %p38 = scmp.eq.s32.totalorder %s21, 1
      %p39 = por %p37, %p38
      %p40 = scmp.ne.s32.totalorder %s29, %s30
      %p41 = scmp.eq.s32.totalorder %s21, 0
      %p42 = por %p40, %p41
      %p43 = scmp.ne.s32.totalorder %s29, %s30
      %p44 = scmp.eq.s32.totalorder %s22, 1
      %p45 = por %p43, %p44
      %p47 = scmp.ne.s32.totalorder %s30, %s46
      %p48 = scmp.eq.s32.totalorder %s22, 0
      %p49 = por %p47, %p48
      %s51 = sadd.s32 %s50, 1
      %p54 = scmp.eq.s32.totalorder %s16, 1
      %p55 = scmp.ne.s32.totalorder %s50, %s52
      %p56 = scmp.eq.s32.totalorder %s16, 0
      %p57 = por %p55, %p56
      %p58 = scmp.ne.s32.totalorder %s50, %s52
      %p59 = scmp.eq.s32.totalorder %s21, 1
      %p60 = por %p58, %p59
      %p61 = scmp.ne.s32.totalorder %s52, %s53
      %p62 = scmp.eq.s32.totalorder %s21, 0
      %p63 = por %p61, %p62
      %p64 = scmp.ne.s32.totalorder %s52, %s53
      %p65 = scmp.eq.s32.totalorder %s22, 1
      %p66 = por %p64, %p65
      %p68 = scmp.ne.s32.totalorder %s53, %s67
      %p69 = scmp.eq.s32.totalorder %s22, 0
      %p70 = por %p68, %p69
      %s72 = sadd.s32 %s71, 1
      %p75 = scmp.eq.s32.totalorder %s16, 1
      %p76 = scmp.ne.s32.totalorder %s71, %s73
      %p77 = scmp.eq.s32.totalorder %s16, 0
      %p78 = por %p76, %p77
      %p79 = scmp.ne.s32.totalorder %s71, %s73
      %p80 = scmp.eq.s32.totalorder %s21, 1
      %p81 = por %p79, %p80
      %p82 = scmp.ne.s32.totalorder %s73, %s74
      %p83 = scmp.eq.s32.totalorder %s21, 0
      %p84 = por %p82, %p83
      %p85 = scmp.ne.s32.totalorder %s73, %s74
      %p86 = scmp.eq.s32.totalorder %s22, 1
      %p87 = por %p85, %p86
      %p89 = scmp.ne.s32.totalorder %s74, %s88
      %p90 = scmp.eq.s32.totalorder %s22, 0
      %p91 = por %p89, %p90
      %s92 = ssub.s32 %s16, %s23
      %p93 = scmp.eq.s32.totalorder %s92, 0
      %s95 = sadd.s32 %s94, 1
      %s96 = scalar_select %p93, %s94, %s95
      %p99 = pneg %p93
      %p100 = scmp.eq.s32.totalorder %s16, 1
      %p101 = por %p99, %p100
      %p102 = scmp.ne.s32.totalorder %s94, %s97
      %p103 = scmp.eq.s32.totalorder %s16, 0
      %p104 = por %p102, %p103
      %p105 = scmp.ne.s32.totalorder %s94, %s97
      %p106 = scmp.eq.s32.totalorder %s21, 1
      %p107 = por %p105, %p106
      %p108 = scmp.ne.s32.totalorder %s97, %s98
      %p109 = scmp.eq.s32.totalorder %s21, 0
      %p110 = por %p108, %p109
      %p111 = scmp.ne.s32.totalorder %s97, %s98
      %p112 = scmp.eq.s32.totalorder %s22, 1
      %p113 = por %p111, %p112
      %p115 = scmp.ne.s32.totalorder %s98, %s114
      %p116 = scmp.eq.s32.totalorder %s22, 0
      %p117 = por %p115, %p116
      %p118 = scmp.le.s32.totalorder 1, %s16
      %p119 = scmp.lt.s32.totalorder %s16, 3
      %p120 = pnand %p118, %p119
      %p121 = pneg %p120
      // Predicated region
      $region9: #{tpu_custom_call.1} parent=5 // pred_check
        _
      $region10: #{tpu_custom_call.1} parent=5 // pred_check_branch
        %123 = sbr.rel (%p120) target = $region12
      $region11: #{tpu_custom_call.1} parent=5 // pred_region
        %s124 = ssub.s32 %s16, 1
        // Predicated region
        $region13: #{tpu_custom_call.1} parent=11 // pred_check
          %p125 = pneg %p63
        $region14: #{tpu_custom_call.1} parent=11 // pred_check_branch
          %127 = sbr.rel (%p125) target = $region16
        $region15: #{tpu_custom_call.1} parent=11 // pred_region
          %s129 = ssub.s32 2048, 2048
          %130 = vsyncadd [#allocation6], %s129
          %s131 = sshll.u32 [#allocation5], 4
          %s132 = int_to_ptr.vmem [resolvable:$true] %s131
          %137 = dma.hbm_to_vmem [thread:$0]  %s1, 2048, %s132, [#allocation6], 128, 128, 8
        $region16: #{tpu_custom_call.1} parent=11 // pred_fallthru
          _
        // Predicated region
        $region17: #{tpu_custom_call.1} parent=11 // pred_check
          %p138 = pneg %p84
        $region18: #{tpu_custom_call.1} parent=11 // pred_check_branch
          %140 = sbr.rel (%p138) target = $region20
        $region19: #{tpu_custom_call.1} parent=11 // pred_region
          _
        $region20: #{tpu_custom_call.1} parent=11 // pred_fallthru
          _
      $region12: #{tpu_custom_call.1} parent=5 // pred_fallthru
        _
      %p141 = scmp.lt.s32.totalorder %s16, 2
      // Predicated region
      $region21: #{tpu_custom_call.1} parent=5 // pred_check
        %p142 = pneg %p141
      $region22: #{tpu_custom_call.1} parent=5 // pred_check_branch
        %144 = sbr.rel (%p142) target = $region24
      $region23: #{tpu_custom_call.1} parent=5 // pred_region
        // Predicated region
        $region25: #{tpu_custom_call.1} parent=23 // pred_check
          %p145 = pneg %p36
        $region26: #{tpu_custom_call.1} parent=23 // pred_check_branch
          %147 = sbr.rel (%p145) target = $region28
        $region27: #{tpu_custom_call.1} parent=23 // pred_region
          %s148 = sand.u32 %s26, 1
          %s149 = scalar_lea.sflag [#allocation3], %s148
          %s150 = sand.u32 %s26, 1
          %s151 = smul.addr %s150, 16
          %s152 = scalar_lea.vmem [#allocation2], %s151
          %s153 = smul.u32 2, %s16
          %s155 = ssub.s32 256, 256
          %156 = vsyncadd %s149, %s155
          %s157 = smul.addr %s153, 128
          %s158 = scalar_lea.hbm %s0, %s157
          %s159 = sshll.u32 %s152, 4
          %s160 = int_to_ptr.vmem [resolvable:$true] %s159
          %165 = dma.hbm_to_vmem [thread:$0]  %s158, 256, %s160, %s149, 128, 128, 8
        $region28: #{tpu_custom_call.1} parent=23 // pred_fallthru
          _
      $region24: #{tpu_custom_call.1} parent=5 // pred_fallthru
        _
      %p166 = scmp.le.s32.totalorder 1, %s16
      %p167 = scmp.lt.s32.totalorder %s16, 3
      %p168 = pnand %p166, %p167
      %p169 = pneg %p168
      // Predicated region
      $region29: #{tpu_custom_call.1} parent=5 // pred_check
        _
      $region30: #{tpu_custom_call.1} parent=5 // pred_check_branch
        %171 = sbr.rel (%p168) target = $region32
      $region31: #{tpu_custom_call.1} parent=5 // pred_region
        %s172 = ssub.s32 %s16, 1
        %s173 = sand.u32 %s29, 1
        %s174 = scalar_lea.sflag [#allocation3], %s173
        %s175 = sand.u32 %s29, 1
        %s176 = smul.addr %s175, 16
        %s177 = scalar_lea.vmem [#allocation2], %s176
        // Predicated region
        $region33: #{tpu_custom_call.1} parent=31 // pred_check
          %p178 = pneg %p42
        $region34: #{tpu_custom_call.1} parent=31 // pred_check_branch
          %180 = sbr.rel (%p178) target = $region36
        $region35: #{tpu_custom_call.1} parent=31 // pred_region
          %181 = dma.done %s174, 256
        $region36: #{tpu_custom_call.1} parent=31 // pred_fallthru
          _
        // Predicated region
        $region37: #{tpu_custom_call.1} parent=31 // pred_check
          %p182 = pneg %p63
        $region38: #{tpu_custom_call.1} parent=31 // pred_check_branch
          %184 = sbr.rel (%p182) target = $region40
        $region39: #{tpu_custom_call.1} parent=31 // pred_region
          %185 = dma.done [#allocation6], 2048
        $region40: #{tpu_custom_call.1} parent=31 // pred_fallthru
          _
        %s186 = sand.u32 %s29, 1
        %s187 = scalar_lea.sflag [#allocation3], %s186
        %s188 = sand.u32 %s29, 1
        %s189 = smul.addr %s188, 16
        %s190 = scalar_lea.vmem [#allocation2], %s189
        %p191 = pneg %p42
        %p192 = pneg %p39
        %p193 = pneg %p63
        %p194 = pneg %p60
        %p195 = pneg %p84
        %p196 = pneg %p81
        %p197 = pneg %p110
        %p198 = pneg %p107
        %s199 = sand.u32 %s97, 1
        %s200 = scalar_lea.sflag [#allocation4], %s199
        %s201 = sand.u32 %s97, 1
        %s202 = smul.addr %s201, 16
        %s203 = scalar_lea.vmem [#allocation7], %s202
        %s204 = smul.u32 2, %s21
        %s205 = smul.u32 2, %s21
        %v206 = vld [vmem:[%s177] sm:$0xff]
        %v207 = vld [vmem:[%s177 + $0x8] sm:$0xff]
        %v208 = vld [vmem:[#allocation5] sm:$0xff]
        %v209 = vld [vmem:[#allocation5 + $0x8] sm:$0xff]
        %v210 = vld [vmem:[#allocation5 + $0x10] sm:$0xff]
        %v211 = vld [vmem:[#allocation5 + $0x18] sm:$0xff]
        %v212 = vld [vmem:[#allocation5 + $0x20] sm:$0xff]
        %v213 = vld [vmem:[#allocation5 + $0x28] sm:$0xff]
        %v214 = vld [vmem:[#allocation5 + $0x30] sm:$0xff]
        %v215 = vld [vmem:[#allocation5 + $0x38] sm:$0xff]
        %v216 = vld [vmem:[#allocation5 + $0x40] sm:$0xff]
        %v217 = vld [vmem:[#allocation5 + $0x48] sm:$0xff]
        %v218 = vld [vmem:[#allocation5 + $0x50] sm:$0xff]
        %v219 = vld [vmem:[#allocation5 + $0x58] sm:$0xff]
        %v220 = vld [vmem:[#allocation5 + $0x60] sm:$0xff]
        %v221 = vld [vmem:[#allocation5 + $0x68] sm:$0xff]
        %v222 = vld [vmem:[#allocation5 + $0x70] sm:$0xff]
        %v223 = vld [vmem:[#allocation5 + $0x78] sm:$0xff]
        %v224 = vld [vmem:[%s2] sm:$0x1]
        %v226 = vlaneseq
        %v227 = vshrl.u32 %v226, 7
        %v228 = vsub.s32 0, %v227
        %v229 = vrot.slane %v224, %v228
        %231 = vmatprep.subr.mxu0 0.0
        %232 = vmatpush1.msra.mxu0 %v223
        %233 = vmatprep.subr.mxu0 0.0
        %234 = vmatpush1.msra.mxu0 %v222
        %235 = vmatprep.subr.mxu0 0.0
        %236 = vmatpush1.msra.mxu0 %v221
        %237 = vmatprep.subr.mxu0 0.0
        %238 = vmatpush1.msra.mxu0 %v220
        %239 = vmatprep.subr.mxu0 0.0
        %240 = vmatpush1.msra.mxu0 %v219
        %241 = vmatprep.subr.mxu0 0.0
        %242 = vmatpush1.msra.mxu0 %v218
        %243 = vmatprep.subr.mxu0 0.0
        %244 = vmatpush1.msra.mxu0 %v217
        %245 = vmatprep.subr.mxu0 0.0
        %246 = vmatpush1.msra.mxu0 %v216
        %247 = vmatprep.subr.mxu0 0.0
        %248 = vmatpush1.msra.mxu0 %v215
        %249 = vmatprep.subr.mxu0 0.0
        %250 = vmatpush1.msra.mxu0 %v214
        %251 = vmatprep.subr.mxu0 0.0
        %252 = vmatpush1.msra.mxu0 %v213
        %253 = vmatprep.subr.mxu0 0.0
        %254 = vmatpush1.msra.mxu0 %v212
        %255 = vmatprep.subr.mxu0 0.0
        %256 = vmatpush1.msra.mxu0 %v211
        %257 = vmatprep.subr.mxu0 0.0
        %258 = vmatpush1.msra.mxu0 %v210
        %259 = vmatprep.subr.mxu0 0.0
        %260 = vmatpush1.msra.mxu0 %v209
        %261 = vmatprep.subr.mxu0 0.0
        %262 = vmatpush1.msra.mxu0 %v208
        %263 = vmatprep.subr.mxu0 0.0
        %264 = vmatpush2.msra.mxu0 0.0
        %265 = vmatprep.subr.mxu0 0.0
        %266 = vmatpush2.msra.mxu0 0.0
        %267 = vmatprep.subr.mxu0 0.0
        %268 = vmatpush2.msra.mxu0 0.0
        %269 = vmatprep.subr.mxu0 0.0
        %270 = vmatpush2.msra.mxu0 0.0
        %271 = vmatprep.subr.mxu0 0.0
        %272 = vmatpush2.msra.mxu0 0.0
        %273 = vmatprep.subr.mxu0 0.0
        %274 = vmatpush2.msra.mxu0 0.0
        %275 = vmatprep.subr.mxu0 0.0
        %276 = vmatpush2.msra.mxu0 0.0
        %277 = vmatprep.subr.mxu0 0.0
        %278 = vmatpush2.msra.mxu0 0.0
        %279 = vmatprep.subr.mxu0 0.0
        %280 = vmatpush2.msra.mxu0 0.0
        %281 = vmatprep.subr.mxu0 0.0
        %282 = vmatpush2.msra.mxu0 0.0
        %283 = vmatprep.subr.mxu0 0.0
        %284 = vmatpush2.msra.mxu0 0.0
        %285 = vmatprep.subr.mxu0 0.0
        %286 = vmatpush2.msra.mxu0 0.0
        %287 = vmatprep.subr.mxu0 0.0
        %288 = vmatpush2.msra.mxu0 0.0
        %289 = vmatprep.subr.mxu0 0.0
        %290 = vmatpush2.msra.mxu0 0.0
        %291 = vmatprep.subr.mxu0 0.0
        %292 = vmatpush2.msra.mxu0 0.0
        %293 = vmatprep.subr.mxu0 0.0
        %294 = vmatpush2.msra.mxu0 0.0
        %295 = vmatprep.mubr.f32.mxu0 0.0
        %296 = vmatmul.mubr.f32.gmra.mxu0 %v206
        %v297 = vpop.f32.mrf.mxu0
        %v298 = vadd.f32 %v229, %v297
        %v299 = vpop.f32.mrf.mxu0
        %300 = vmatprep.mubr.f32.mxu0 0.0
        %301 = vmatmul.mubr.f32.gmra.mxu0 %v207
        %v302 = vpop.f32.mrf.mxu0
        %v303 = vadd.f32 %v229, %v302
        %v304 = vpop.f32.mrf.mxu0
        %305 = vdwg.mxu0
        %306 = vst [vmem:[%s203] sm:$0xff] %v298
        %307 = vst [vmem:[%s203 + $0x8] sm:$0xff] %v303
        %s308 = sand.u32 %s97, 1
        %s309 = scalar_lea.sflag [#allocation4], %s308
        %s310 = sand.u32 %s97, 1
        %s311 = smul.addr %s310, 16
        %s312 = scalar_lea.vmem [#allocation7], %s311
        // Predicated region
        $region41: #{tpu_custom_call.1} parent=31 // pred_check
          %p313 = pneg %p107
        $region42: #{tpu_custom_call.1} parent=31 // pred_check_branch
          %315 = sbr.rel (%p313) target = $region44
        $region43: #{tpu_custom_call.1} parent=31 // pred_region
          %s316 = smul.u32 2, %s21
          %s318 = ssub.s32 256, 256
          %319 = vsyncadd %s309, %s318
          %s320 = smul.addr %s316, 128
          %s321 = scalar_lea.hbm %s3, %s320
          %s322 = sshll.u32 %s312, 4
          %s323 = int_to_ptr.vmem [resolvable:$true] %s322
          %328 = dma.vmem_to_hbm [thread:$0]  %s323, 256, %s321, %s309, 128, 128, 8
        $region44: #{tpu_custom_call.1} parent=31 // pred_fallthru
          _
      $region32: #{tpu_custom_call.1} parent=5 // pred_fallthru
        _
      %p329 = scmp.le.s32.totalorder 2, %s16
      // Predicated region
      $region45: #{tpu_custom_call.1} parent=5 // pred_check
        %p330 = pneg %p329
      $region46: #{tpu_custom_call.1} parent=5 // pred_check_branch
        %332 = sbr.rel (%p330) target = $region48
      $region47: #{tpu_custom_call.1} parent=5 // pred_region
        %s333 = ssub.s32 %s16, 2
        // Predicated region
        $region49: #{tpu_custom_call.1} parent=47 // pred_check
          %p334 = pneg %p113
        $region50: #{tpu_custom_call.1} parent=47 // pred_check_branch
          %336 = sbr.rel (%p334) target = $region52
        $region51: #{tpu_custom_call.1} parent=47 // pred_region
          %s337 = sand.u32 %s98, 1
          %s338 = scalar_lea.sflag [#allocation4], %s337
          %s339 = sand.u32 %s98, 1
          %s340 = smul.addr %s339, 16
          %s341 = scalar_lea.vmem [#allocation7], %s340
          %342 = dma.done %s338, 256
        $region52: #{tpu_custom_call.1} parent=47 // pred_fallthru
          _
      $region48: #{tpu_custom_call.1} parent=5 // pred_fallthru
        _
    $region6: #{tpu_custom_call.1} parent=1 // loop_footer
      %s20 = sadd.s32 1, %s16
    $region7: #{tpu_custom_call.1} parent=1 // loop_footer_branch
      %15 = sbr.rel target = $region3
    $region8: #{tpu_custom_call.1} parent=1 // loop_exit
      _
    %343 = vsyncpa [#allocation3], 1
    %s344 = scalar_lea.sflag [#allocation3], 1
    %345 = vsyncpa %s344, 1
    %346 = vsyncpa [#allocation6], 1
    %347 = vsyncpa [#allocation4], 1
    %s348 = scalar_lea.sflag [#allocation4], 1
    %349 = vsyncpa %s348, 1

// kernel: tpu_custom_call.1
$region0: #{tpu_custom_call.1}
  #allocation0 [shape = 'u32[]', space=smem, size = 0x4, offset = 0x4, fixed_abs, tag = 'smem constant byte address 0x4 - core index']
  #allocation1 [shape = 'u32[144,128]{1,0:T(1,128)}', space=vmem, size = 0x12000, scoped, tag = 'internal scratch']
  %s0 = inlined_call_operand.hbm [shape: f32[32,128], index: 0, kind: input, shape index: {}]
  %s1 = inlined_call_operand.hbm [shape: f32[128,128], index: 1, kind: input, shape index: {}]
  %s2 = inlined_call_operand.vmem [shape: f32[1,128], index: 2, kind: input, shape index: {}]
  %s3 = inlined_call_operand.hbm [shape: f32[32,128], index: 3, kind: output, shape index: {}]
  %s4 = sld [smem:[#allocation0]]
  $region53: #{tpu_custom_call.1} parent=0
    _
  %s6 = ssub.s32 1, %s4
  %s7 = scalar_select 0, %s6, %s4
  $region1: #{tpu_custom_call.1} parent=0
    #allocation2 [shape = 'u8[16384]{0}', space=vmem, size = 0x4000, scoped, tag = 'input window, operand 0']
    #allocation3 [shape = 's32[2]{0}', space=sflag, size = 0x8, scoped, tag = 'scoped memory for tpu_custom_call.1']
    #allocation4 [shape = 's32[2]{0}', space=sflag, size = 0x8, scoped, tag = 'scoped memory for tpu_custom_call.1']
    #allocation5 [shape = 'u8[65536]{0}', space=vmem, size = 0x10000, scoped, tag = 'input window, operand 1, single buffered']
    #allocation6 [shape = 's32[1]{0}', space=sflag, size = 0x4, scoped, tag = 'scoped memory for tpu_custom_call.1']
    #allocation7 [shape = 'u8[16384]{0}', space=vmem, size = 0x4000, scoped, tag = 'output window, operand 0']
    %8 = vsyncpa [#allocation3], 0
    %s9 = scalar_lea.sflag [#allocation3], 1
    %10 = vsyncpa %s9, 0
    %11 = vsyncpa [#allocation6], 0
    %12 = vsyncpa [#allocation4], 0
    %s13 = scalar_lea.sflag [#allocation4], 1
    %14 = vsyncpa %s13, 0
    loop: start=0, step=1, limit=4
    $region2: #{tpu_custom_call.1} parent=1 // loop_pre_header
      _
    $region3: #{tpu_custom_call.1} parent=1 // loop_header
      %s16 = sphi 0, %s20
      %p17 = scmp.ge.s32.totalorder %s16, 4
      %s26 = sphi 0, %s28
      %s29 = sphi 0, %s26
      %s30 = sphi 0, %s29
      %s46 = sphi 0, %s30
      %s50 = sphi 0, %s50
      %s52 = sphi 0, %s50
      %s53 = sphi 0, %s52
      %s67 = sphi 0, %s53
      %s71 = sphi 0, %s71
      %s73 = sphi 0, %s71
      %s74 = sphi 0, %s73
      %s88 = sphi 0, %s74
      %s94 = sphi 0, %s96
      %s97 = sphi 0, %s94
      %s98 = sphi 0, %s97
      %s114 = sphi 0, %s98
    $region4: #{tpu_custom_call.1} parent=1 // loop_header_branch
      %19 = sbr.rel (%p17) target = $region8
    $region5: #{tpu_custom_call.1} parent=1 // loop_body
      %s21 = ssub.s32 %s16, 1
      %s22 = ssub.s32 %s16, 2
      %s23 = sadd.s32 %s16, 1
      %s24 = ssub.s32 %s16, %s23
      %p25 = scmp.eq.s32.totalorder %s24, 0
      %s27 = sadd.s32 %s26, 1
      %s28 = scalar_select %p25, %s26, %s27
      %p31 = pneg %p25
      %p32 = scmp.eq.s32.totalorder %s16, 1
      %p33 = por %p31, %p32
      %p34 = scmp.ne.s32.totalorder %s26, %s29
      %p35 = scmp.eq.s32.totalorder %s16, 0
      %p36 = por %p34, %p35
      %p37 = scmp.ne.s32.totalorder %s26, %s29
      %p38 = scmp.eq.s32.totalorder %s21, 1
      %p39 = por %p37, %p38
      %p40 = scmp.ne.s32.totalorder %s29, %s30
      %p41 = scmp.eq.s32.totalorder %s21, 0
      %p42 = por %p40, %p41
      %p43 = scmp.ne.s32.totalorder %s29, %s30
      %p44 = scmp.eq.s32.totalorder %s22, 1
      %p45 = por %p43, %p44
      %p47 = scmp.ne.s32.totalorder %s30, %s46
      %p48 = scmp.eq.s32.totalorder %s22, 0
      %p49 = por %p47, %p48
      %s51 = sadd.s32 %s50, 1
      %p54 = scmp.eq.s32.totalorder %s16, 1
      %p55 = scmp.ne.s32.totalorder %s50, %s52
      %p56 = scmp.eq.s32.totalorder %s16, 0
      %p57 = por %p55, %p56
      %p58 = scmp.ne.s32.totalorder %s50, %s52
      %p59 = scmp.eq.s32.totalorder %s21, 1
      %p60 = por %p58, %p59
      %p61 = scmp.ne.s32.totalorder %s52, %s53
      %p62 = scmp.eq.s32.totalorder %s21, 0
      %p63 = por %p61, %p62
      %p64 = scmp.ne.s32.totalorder %s52, %s53
      %p65 = scmp.eq.s32.totalorder %s22, 1
      %p66 = por %p64, %p65
      %p68 = scmp.ne.s32.totalorder %s53, %s67
      %p69 = scmp.eq.s32.totalorder %s22, 0
      %p70 = por %p68, %p69
      %s72 = sadd.s32 %s71, 1
      %p75 = scmp.eq.s32.totalorder %s16, 1
      %p76 = scmp.ne.s32.totalorder %s71, %s73
      %p77 = scmp.eq.s32.totalorder %s16, 0
      %p78 = por %p76, %p77
      %p79 = scmp.ne.s32.totalorder %s71, %s73
      %p80 = scmp.eq.s32.totalorder %s21, 1
      %p81 = por %p79, %p80
      %p82 = scmp.ne.s32.totalorder %s73, %s74
      %p83 = scmp.eq.s32.totalorder %s21, 0
      %p84 = por %p82, %p83
      %p85 = scmp.ne.s32.totalorder %s73, %s74
      %p86 = scmp.eq.s32.totalorder %s22, 1
      %p87 = por %p85, %p86
      %p89 = scmp.ne.s32.totalorder %s74, %s88
      %p90 = scmp.eq.s32.totalorder %s22, 0
      %p91 = por %p89, %p90
      %s92 = ssub.s32 %s16, %s23
      %p93 = scmp.eq.s32.totalorder %s92, 0
      %s95 = sadd.s32 %s94, 1
      %s96 = scalar_select %p93, %s94, %s95
      %p99 = pneg %p93
      %p100 = scmp.eq.s32.totalorder %s16, 1
      %p101 = por %p99, %p100
      %p102 = scmp.ne.s32.totalorder %s94, %s97
      %p103 = scmp.eq.s32.totalorder %s16, 0
      %p104 = por %p102, %p103
      %p105 = scmp.ne.s32.totalorder %s94, %s97
      %p106 = scmp.eq.s32.totalorder %s21, 1
      %p107 = por %p105, %p106
      %p108 = scmp.ne.s32.totalorder %s97, %s98
      %p109 = scmp.eq.s32.totalorder %s21, 0
      %p110 = por %p108, %p109
      %p111 = scmp.ne.s32.totalorder %s97, %s98
      %p112 = scmp.eq.s32.totalorder %s22, 1
      %p113 = por %p111, %p112
      %p115 = scmp.ne.s32.totalorder %s98, %s114
      %p116 = scmp.eq.s32.totalorder %s22, 0
      %p117 = por %p115, %p116
      %p118 = scmp.le.s32.totalorder 1, %s16
      %p119 = scmp.lt.s32.totalorder %s16, 3
      %p120 = pnand %p118, %p119
      %p121 = pneg %p120
      // Predicated region
      $region9: #{tpu_custom_call.1} parent=5 // pred_check
        _
      $region10: #{tpu_custom_call.1} parent=5 // pred_check_branch
        %123 = sbr.rel (%p120) target = $region12
      $region11: #{tpu_custom_call.1} parent=5 // pred_region
        %s124 = ssub.s32 %s16, 1
        // Predicated region
        $region13: #{tpu_custom_call.1} parent=11 // pred_check
          %p125 = pneg %p63
        $region14: #{tpu_custom_call.1} parent=11 // pred_check_branch
          %127 = sbr.rel (%p125) target = $region16
        $region15: #{tpu_custom_call.1} parent=11 // pred_region
          %s129 = ssub.s32 2048, 2048
          %130 = vsyncadd [#allocation6], %s129
          %s131 = sshll.u32 [#allocation5], 4
          %s132 = int_to_ptr.vmem [resolvable:$true] %s131
          %137 = dma.hbm_to_vmem [thread:$0]  %s1, 2048, %s132, [#allocation6], 128, 128, 8
        $region16: #{tpu_custom_call.1} parent=11 // pred_fallthru
          _
        // Predicated region
        $region17: #{tpu_custom_call.1} parent=11 // pred_check
          %p138 = pneg %p84
        $region18: #{tpu_custom_call.1} parent=11 // pred_check_branch
          %140 = sbr.rel (%p138) target = $region20
        $region19: #{tpu_custom_call.1} parent=11 // pred_region
          _
        $region20: #{tpu_custom_call.1} parent=11 // pred_fallthru
          _
      $region12: #{tpu_custom_call.1} parent=5 // pred_fallthru
        _
      %p141 = scmp.lt.s32.totalorder %s16, 2
      // Predicated region
      $region21: #{tpu_custom_call.1} parent=5 // pred_check
        %p142 = pneg %p141
      $region22: #{tpu_custom_call.1} parent=5 // pred_check_branch
        %144 = sbr.rel (%p142) target = $region24
      $region23: #{tpu_custom_call.1} parent=5 // pred_region
        // Predicated region
        $region25: #{tpu_custom_call.1} parent=23 // pred_check
          %p145 = pneg %p36
        $region26: #{tpu_custom_call.1} parent=23 // pred_check_branch
          %147 = sbr.rel (%p145) target = $region28
        $region27: #{tpu_custom_call.1} parent=23 // pred_region
          %s148 = sand.u32 %s26, 1
          %s149 = scalar_lea.sflag [#allocation3], %s148
          %s150 = sand.u32 %s26, 1
          %s151 = smul.addr %s150, 16
          %s152 = scalar_lea.vmem [#allocation2], %s151
          %s153 = smul.u32 2, %s16
          %s155 = ssub.s32 256, 256
          %156 = vsyncadd %s149, %s155
          %s157 = smul.addr %s153, 128
          %s158 = scalar_lea.hbm %s0, %s157
          %s159 = sshll.u32 %s152, 4
          %s160 = int_to_ptr.vmem [resolvable:$true] %s159
          %165 = dma.hbm_to_vmem [thread:$0]  %s158, 256, %s160, %s149, 128, 128, 8
        $region28: #{tpu_custom_call.1} parent=23 // pred_fallthru
          _
      $region24: #{tpu_custom_call.1} parent=5 // pred_fallthru
        _
      %p166 = scmp.le.s32.totalorder 1, %s16
      %p167 = scmp.lt.s32.totalorder %s16, 3
      %p168 = pnand %p166, %p167
      %p169 = pneg %p168
      // Predicated region
      $region29: #{tpu_custom_call.1} parent=5 // pred_check
        _
      $region30: #{tpu_custom_call.1} parent=5 // pred_check_branch
        %171 = sbr.rel (%p168) target = $region32
      $region31: #{tpu_custom_call.1} parent=5 // pred_region
        %s172 = ssub.s32 %s16, 1
        %s173 = sand.u32 %s29, 1
        %s174 = scalar_lea.sflag [#allocation3], %s173
        %s175 = sand.u32 %s29, 1
        %s176 = smul.addr %s175, 16
        %s177 = scalar_lea.vmem [#allocation2], %s176
        // Predicated region
        $region33: #{tpu_custom_call.1} parent=31 // pred_check
          %p178 = pneg %p42
        $region34: #{tpu_custom_call.1} parent=31 // pred_check_branch
          %180 = sbr.rel (%p178) target = $region36
        $region35: #{tpu_custom_call.1} parent=31 // pred_region
          %181 = dma.done %s174, 256
        $region36: #{tpu_custom_call.1} parent=31 // pred_fallthru
          _
        // Predicated region
        $region37: #{tpu_custom_call.1} parent=31 // pred_check
          %p182 = pneg %p63
        $region38: #{tpu_custom_call.1} parent=31 // pred_check_branch
          %184 = sbr.rel (%p182) target = $region40
        $region39: #{tpu_custom_call.1} parent=31 // pred_region
          %185 = dma.done [#allocation6], 2048
        $region40: #{tpu_custom_call.1} parent=31 // pred_fallthru
          _
        %s186 = sand.u32 %s29, 1
        %s187 = scalar_lea.sflag [#allocation3], %s186
        %s188 = sand.u32 %s29, 1
        %s189 = smul.addr %s188, 16
        %s190 = scalar_lea.vmem [#allocation2], %s189
        %p191 = pneg %p42
        %p192 = pneg %p39
        %p193 = pneg %p63
        %p194 = pneg %p60
        %p195 = pneg %p84
        %p196 = pneg %p81
        %p197 = pneg %p110
        %p198 = pneg %p107
        %s199 = sand.u32 %s97, 1
        %s200 = scalar_lea.sflag [#allocation4], %s199
        %s201 = sand.u32 %s97, 1
        %s202 = smul.addr %s201, 16
        %s203 = scalar_lea.vmem [#allocation7], %s202
        %s204 = smul.u32 2, %s21
        %s205 = smul.u32 2, %s21
        %v206 = vld [vmem:[%s177] sm:$0xff]
        %v207 = vld [vmem:[%s177 + $0x8] sm:$0xff]
        %v208 = vld [vmem:[#allocation5] sm:$0xff]
        %v209 = vld [vmem:[#allocation5 + $0x8] sm:$0xff]
        %v210 = vld [vmem:[#allocation5 + $0x10] sm:$0xff]
        %v211 = vld [vmem:[#allocation5 + $0x18] sm:$0xff]
        %v212 = vld [vmem:[#allocation5 + $0x20] sm:$0xff]
        %v213 = vld [vmem:[#allocation5 + $0x28] sm:$0xff]
        %v214 = vld [vmem:[#allocation5 + $0x30] sm:$0xff]
        %v215 = vld [vmem:[#allocation5 + $0x38] sm:$0xff]
        %v216 = vld [vmem:[#allocation5 + $0x40] sm:$0xff]
        %v217 = vld [vmem:[#allocation5 + $0x48] sm:$0xff]
        %v218 = vld [vmem:[#allocation5 + $0x50] sm:$0xff]
        %v219 = vld [vmem:[#allocation5 + $0x58] sm:$0xff]
        %v220 = vld [vmem:[#allocation5 + $0x60] sm:$0xff]
        %v221 = vld [vmem:[#allocation5 + $0x68] sm:$0xff]
        %v222 = vld [vmem:[#allocation5 + $0x70] sm:$0xff]
        %v223 = vld [vmem:[#allocation5 + $0x78] sm:$0xff]
        %v224 = vld [vmem:[%s2] sm:$0x1]
        %v226 = vlaneseq
        %v227 = vshrl.u32 %v226, 7
        %v228 = vsub.s32 0, %v227
        %v229 = vrot.slane %v224, %v228
        %231 = vmatprep.subr.mxu0 0.0
        %232 = vmatpush1.msra.mxu0 %v223
        %233 = vmatprep.subr.mxu0 0.0
        %234 = vmatpush1.msra.mxu0 %v222
        %235 = vmatprep.subr.mxu0 0.0
        %236 = vmatpush1.msra.mxu0 %v221
        %237 = vmatprep.subr.mxu0 0.0
        %238 = vmatpush1.msra.mxu0 %v220
        %239 = vmatprep.subr.mxu0 0.0
        %240 = vmatpush1.msra.mxu0 %v219
        %241 = vmatprep.subr.mxu0 0.0
        %242 = vmatpush1.msra.mxu0 %v218
        %243 = vmatprep.subr.mxu0 0.0
        %244 = vmatpush1.msra.mxu0 %v217
        %245 = vmatprep.subr.mxu0 0.0
        %246 = vmatpush1.msra.mxu0 %v216
        %247 = vmatprep.subr.mxu0 0.0
        %248 = vmatpush1.msra.mxu0 %v215
        %249 = vmatprep.subr.mxu0 0.0
        %250 = vmatpush1.msra.mxu0 %v214
        %251 = vmatprep.subr.mxu0 0.0
        %252 = vmatpush1.msra.mxu0 %v213
        %253 = vmatprep.subr.mxu0 0.0
        %254 = vmatpush1.msra.mxu0 %v212
        %255 = vmatprep.subr.mxu0 0.0
        %256 = vmatpush1.msra.mxu0 %v211
        %257 = vmatprep.subr.mxu0 0.0
        %258 = vmatpush1.msra.mxu0 %v210
        %259 = vmatprep.subr.mxu0 0.0
        %260 = vmatpush1.msra.mxu0 %v209
        %261 = vmatprep.subr.mxu0 0.0
        %262 = vmatpush1.msra.mxu0 %v208
        %263 = vmatprep.subr.mxu0 0.0
        %264 = vmatpush2.msra.mxu0 0.0
        %265 = vmatprep.subr.mxu0 0.0
        %266 = vmatpush2.msra.mxu0 0.0
        %267 = vmatprep.subr.mxu0 0.0
        %268 = vmatpush2.msra.mxu0 0.0
        %269 = vmatprep.subr.mxu0 0.0
        %270 = vmatpush2.msra.mxu0 0.0
        %271 = vmatprep.subr.mxu0 0.0
        %272 = vmatpush2.msra.mxu0 0.0
        %273 = vmatprep.subr.mxu0 0.0
        %274 = vmatpush2.msra.mxu0 0.0
        %275 = vmatprep.subr.mxu0 0.0
        %276 = vmatpush2.msra.mxu0 0.0
        %277 = vmatprep.subr.mxu0 0.0
        %278 = vmatpush2.msra.mxu0 0.0
        %279 = vmatprep.subr.mxu0 0.0
        %280 = vmatpush2.msra.mxu0 0.0
        %281 = vmatprep.subr.mxu0 0.0
        %282 = vmatpush2.msra.mxu0 0.0
        %283 = vmatprep.subr.mxu0 0.0
        %284 = vmatpush2.msra.mxu0 0.0
        %285 = vmatprep.subr.mxu0 0.0
        %286 = vmatpush2.msra.mxu0 0.0
        %287 = vmatprep.subr.mxu0 0.0
        %288 = vmatpush2.msra.mxu0 0.0
        %289 = vmatprep.subr.mxu0 0.0
        %290 = vmatpush2.msra.mxu0 0.0
        %291 = vmatprep.subr.mxu0 0.0
        %292 = vmatpush2.msra.mxu0 0.0
        %293 = vmatprep.subr.mxu0 0.0
        %294 = vmatpush2.msra.mxu0 0.0
        %295 = vmatprep.mubr.f32.mxu0 0.0
        %296 = vmatmul.mubr.f32.gmra.mxu0 %v206
        %v297 = vpop.f32.mrf.mxu0
        %v298 = vadd.f32 %v229, %v297
        %v299 = vpop.f32.mrf.mxu0
        %300 = vmatprep.mubr.f32.mxu0 0.0
        %301 = vmatmul.mubr.f32.gmra.mxu0 %v207
        %v302 = vpop.f32.mrf.mxu0
        %v303 = vadd.f32 %v229, %v302
        %v304 = vpop.f32.mrf.mxu0
        %305 = vdwg.mxu0
        %306 = vst [vmem:[%s203] sm:$0xff] %v298
        %307 = vst [vmem:[%s203 + $0x8] sm:$0xff] %v303
        %s308 = sand.u32 %s97, 1
        %s309 = scalar_lea.sflag [#allocation4], %s308
        %s310 = sand.u32 %s97, 1
        %s311 = smul.addr %s310, 16
        %s312 = scalar_lea.vmem [#allocation7], %s311
        // Predicated region
        $region41: #{tpu_custom_call.1} parent=31 // pred_check
          %p313 = pneg %p107
        $region42: #{tpu_custom_call.1} parent=31 // pred_check_branch
          %315 = sbr.rel (%p313) target = $region44
        $region43: #{tpu_custom_call.1} parent=31 // pred_region
          %s316 = smul.u32 2, %s21
          %s318 = ssub.s32 256, 256
          %319 = vsyncadd %s309, %s318
          %s320 = smul.addr %s316, 128
          %s321 = scalar_lea.hbm %s3, %s320
          %s322 = sshll.u32 %s312, 4
          %s323 = int_to_ptr.vmem [resolvable:$true] %s322
          %328 = dma.vmem_to_hbm [thread:$0]  %s323, 256, %s321, %s309, 128, 128, 8
        $region44: #{tpu_custom_call.1} parent=31 // pred_fallthru
          _
      $region32: #{tpu_custom_call.1} parent=5 // pred_fallthru
        _
      %p329 = scmp.le.s32.totalorder 2, %s16
      // Predicated region
      $region45: #{tpu_custom_call.1} parent=5 // pred_check
        %p330 = pneg %p329
      $region46: #{tpu_custom_call.1} parent=5 // pred_check_branch
        %332 = sbr.rel (%p330) target = $region48
      $region47: #{tpu_custom_call.1} parent=5 // pred_region
        %s333 = ssub.s32 %s16, 2
        // Predicated region
        $region49: #{tpu_custom_call.1} parent=47 // pred_check
          %p334 = pneg %p113
        $region50: #{tpu_custom_call.1} parent=47 // pred_check_branch
          %336 = sbr.rel (%p334) target = $region52
        $region51: #{tpu_custom_call.1} parent=47 // pred_region
          %s337 = sand.u32 %s98, 1
          %s338 = scalar_lea.sflag [#allocation4], %s337
          %s339 = sand.u32 %s98, 1
          %s340 = smul.addr %s339, 16
          %s341 = scalar_lea.vmem [#allocation7], %s340
          %342 = dma.done %s338, 256
        $region52: #{tpu_custom_call.1} parent=47 // pred_fallthru
          _
      $region48: #{tpu_custom_call.1} parent=5 // pred_fallthru
        _
    $region6: #{tpu_custom_call.1} parent=1 // loop_footer
      %s20 = sadd.s32 1, %s16
    $region7: #{tpu_custom_call.1} parent=1 // loop_footer_branch
      %15 = sbr.rel target = $region3
    $region8: #{tpu_custom_call.1} parent=1 // loop_exit
      _
    %343 = vsyncpa [#allocation3], 1
    %s344 = scalar_lea.sflag [#allocation3], 1
    %345 = vsyncpa %s344, 1
    %346 = vsyncpa [#allocation6], 1
    %347 = vsyncpa [#allocation4], 1
    %s348 = scalar_lea.sflag [#allocation4], 1
    %349 = vsyncpa %s348, 1

</llo_original>
